<compile_context>
chip_gen: v5e
topology: v5e:2x2
jax: 0.10.0
libtpu: 0.0.40
codegen_flags: <defaults>
</compile_context>

<pallas_src>
import functools

import jax
import jax.numpy as jnp
from jax import lax
from jax.experimental import pallas as pl
from jax.experimental.pallas import tpu as pltpu


def _euclid_flash_kernel(*refs, inv_scale, eps2, has_mask):
    """One (batch, q-tile, k-tile) grid step, all heads at once.

    refs:
      with mask   : q, k, v, mask, o, m_sc, l_sc, acc_sc
      without mask: q, k, v,       o, m_sc, l_sc, acc_sc
    q/k/v/o blocks: (H, tile, dh); scratch m/l: (H, tq, 1); acc: (H, tq, dh).
    """
    if has_mask:
        q_ref, k_ref, v_ref, mask_ref, o_ref, m_sc, l_sc, acc_sc = refs
    else:
        q_ref, k_ref, v_ref, o_ref, m_sc, l_sc, acc_sc = refs
        mask_ref = None

    ki = pl.program_id(2)

    @pl.when(ki == 0)
    def _():
        m_sc[...] = jnp.full_like(m_sc, -jnp.inf)
        l_sc[...] = jnp.zeros_like(l_sc)
        acc_sc[...] = jnp.zeros_like(acc_sc)

    q = q_ref[...]            # (H, tq, dh) f32
    k = k_ref[...]            # (H, tk, dh) f32
    v = v_ref[...]            # (H, tk, dh) f32

    # Pairwise squared Euclidean distance: |q|^2 + |k|^2 - 2 q.k, clamped at 0.
    # No in-kernel transpose: batched dot_general contracts the dh axes directly.
    q_sq = jnp.sum(q * q, axis=-1, keepdims=True)            # (H, tq, 1)
    k_sq = jnp.sum(k * k, axis=-1)[:, None, :]               # (H, 1, tk)
    qk = lax.dot_general(                                     # (H, tq, tk) on MXU
        q, k, dimension_numbers=(((2,), (2,)), ((0,), (0,))),
        preferred_element_type=jnp.float32)
    d2 = jnp.maximum(q_sq + k_sq - 2.0 * qk, 0.0)

    # Fused sqrt + reciprocal:
    #   1 / (scale*sqrt(d2) + 1e-9)  ~=  inv_scale * rsqrt(d2 + eps2)
    # with eps2 = (1e-9/scale)^2 so the score is capped at 1e9 like the reference.
    s = inv_scale * lax.rsqrt(d2 + eps2)                      # (H, tq, tk)

    if has_mask:
        # mask == 1 -> additive -1e9 (same semantics as the PyTorch module).
        s = s + mask_ref[...][None, :, :] * (-1e9)

    # Online softmax over the key axis.
    m_prev = m_sc[...]
    m_new = jnp.maximum(m_prev, jnp.max(s, axis=-1, keepdims=True))
    alpha = jnp.exp(m_prev - m_new)
    p = jnp.exp(s - m_new)
    l_sc[...] = alpha * l_sc[...] + jnp.sum(p, axis=-1, keepdims=True)
    acc_sc[...] = alpha * acc_sc[...] + lax.dot_general(
        p, v, dimension_numbers=(((2,), (1,)), ((0,), (0,))),
        preferred_element_type=jnp.float32)
    m_sc[...] = m_new

    # TODO(synk): dropout is implemented as identity (eval-mode semantics).
    @pl.when(ki == pl.num_programs(2) - 1)
    def _():
        o_ref[...] = (acc_sc[...] *
                      pl.reciprocal(l_sc[...], approx=False)).astype(o_ref.dtype)


def _pick_tile(size, candidates):
    for c in candidates:
        if size % c == 0:
            return c
    return size   # small / odd extents: use the full dimension (single tile)


def scaled_euclid_distance_attention(q, k, v, num_heads, mask=None):
    """JAX/Pallas equivalent of ScaledEuclidDistanceAttention.forward (eval mode).

    q, k, v: (B, S, D) float32.  mask: optional (Sq, Sk), added * -1e9.
    Returns (B, Sq, D) float32.
    """
    B, Sq, D = q.shape
    _, Sk, _ = k.shape
    assert D % num_heads == 0
    dh = D // num_heads
    inv_scale = float(dh) ** 0.5          # 1/scale, scale = dh ** -0.5
    eps2 = float(dh) * 1e-18              # (1e-9 / scale) ** 2

    # (B, S, D) -> (B, H, S, dh).  dh < 128 cannot be a legal lane-dim block on
    # the (B, S, D) layout, so these relayouts are accepted knowingly.
    qh = q.reshape(B, Sq, num_heads, dh).transpose(0, 2, 1, 3)
    kh = k.reshape(B, Sk, num_heads, dh).transpose(0, 2, 1, 3)
    vh = v.reshape(B, Sk, num_heads, dh).transpose(0, 2, 1, 3)

    # Lane-dense tiles when S allows (256/128 multiples), full extent otherwise.
    tq = _pick_tile(Sq, (128,))
    tk = _pick_tile(Sk, (256, 128))

    has_mask = mask is not None
    in_specs = [
        pl.BlockSpec((None, num_heads, tq, dh), lambda b, qi, ki: (b, 0, qi, 0)),
        pl.BlockSpec((None, num_heads, tk, dh), lambda b, qi, ki: (b, 0, ki, 0)),
        pl.BlockSpec((None, num_heads, tk, dh), lambda b, qi, ki: (b, 0, ki, 0)),
    ]
    operands = [qh, kh, vh]
    if has_mask:
        in_specs.append(pl.BlockSpec((tq, tk), lambda b, qi, ki: (qi, ki)))
        operands.append(mask.astype(jnp.float32))

    kernel = functools.partial(_euclid_flash_kernel, inv_scale=inv_scale,
                               eps2=eps2, has_mask=has_mask)

    out = pl.pallas_call(
        kernel,
        out_shape=jax.ShapeDtypeStruct((B, num_heads, Sq, dh), jnp.float32),
        grid_spec=pltpu.PrefetchScalarGridSpec(
            num_scalar_prefetch=0,
            grid=(B, Sq // tq, Sk // tk),
            in_specs=in_specs,
            out_specs=pl.BlockSpec((None, num_heads, tq, dh),
                                   lambda b, qi, ki: (b, 0, qi, 0)),
            scratch_shapes=[
                pltpu.VMEM((num_heads, tq, 1), jnp.float32),   # running max m
                pltpu.VMEM((num_heads, tq, 1), jnp.float32),   # running sum l
                pltpu.VMEM((num_heads, tq, dh), jnp.float32),  # output acc
            ],
        ),
        compiler_params=pltpu.CompilerParams(
            dimension_semantics=("parallel", "parallel", "arbitrary"),
            vmem_limit_bytes=32 * 1024 * 1024,
        ),
    )(*operands)

    # (B, H, Sq, dh) -> (B, Sq, D)
    return out.transpose(0, 2, 1, 3).reshape(B, Sq, D)


def _reference(q, k, v, num_heads, mask=None):
    """Pure-JAX reference mirroring the PyTorch forward (eval mode)."""
    B, Sq, D = q.shape
    _, Sk, _ = k.shape
    dh = D // num_heads
    scale = dh ** (-0.5)
    qh = q.reshape(B, Sq, num_heads, dh).transpose(0, 2, 1, 3)
    kh = k.reshape(B, Sk, num_heads, dh).transpose(0, 2, 1, 3)
    vh = v.reshape(B, Sk, num_heads, dh).transpose(0, 2, 1, 3)
    diff = qh[:, :, :, None, :] - kh[:, :, None, :, :]
    dist = jnp.sqrt(jnp.sum(diff * diff, axis=-1)) * scale
    attn = 1.0 / (dist + 1e-9)
    if mask is not None:
        attn = attn + mask[None, None].astype(jnp.float32) * (-1e9)
    attn = jax.nn.softmax(attn, axis=-1)
    x = jnp.einsum('bhqk,bhkd->bhqd', attn, vh)
    return x.transpose(0, 2, 1, 3).reshape(B, Sq, D)


if __name__ == "__main__":
    B, S, D, H = 2, 8, 32, 4   # dim_hidden=32, num_heads=4 -> dim_head=8
    key = jax.random.PRNGKey(0)
    kq, kk, kv = jax.random.split(key, 3)
    q = jax.random.normal(kq, (B, S, D), jnp.float32)
    k = jax.random.normal(kk, (B, S, D), jnp.float32)
    v = jax.random.normal(kv, (B, S, D), jnp.float32)

    # 1) mask=None path: no mask operand is compiled at all.
    out = jax.block_until_ready(
        scaled_euclid_distance_attention(q, k, v, num_heads=H))
    ref = _reference(q, k, v, num_heads=H)
    assert out.shape == (B, S, D)
    assert jnp.allclose(out, ref, atol=2e-4, rtol=2e-4), (
        f"max abs err {jnp.max(jnp.abs(out - ref))}")

    # 2) masked path: (tq, tk)-tiled mask blocks.
    mask = (jnp.arange(S)[None, :] > jnp.arange(S)[:, None]).astype(jnp.float32)
    out_m = jax.block_until_ready(
        scaled_euclid_distance_attention(q, k, v, num_heads=H, mask=mask))
    ref_m = _reference(q, k, v, num_heads=H, mask=mask)
    assert jnp.allclose(out_m, ref_m, atol=2e-4, rtol=2e-4), (
        f"max abs err {jnp.max(jnp.abs(out_m - ref_m))}")

    print("KERNEL_OK")
</pallas_src>

<mosaic_0001>
module attributes {stable_mosaic.version = 11 : i64} {
  func.func @_euclid_flash_kernel(%arg0: i32, %arg1: i32, %arg2: i32, %arg3: memref<1x4x8x8xf32, #tpu.memory_space<vmem>>, %arg4: memref<1x4x8x8xf32, #tpu.memory_space<vmem>>, %arg5: memref<1x4x8x8xf32, #tpu.memory_space<vmem>>, %arg6: memref<1x4x8x8xf32, #tpu.memory_space<vmem>>, %arg7: memref<4x8x1xf32, #tpu.memory_space<vmem>>, %arg8: memref<4x8x1xf32, #tpu.memory_space<vmem>>, %arg9: memref<4x8x8xf32, #tpu.memory_space<vmem>>) attributes {dimension_semantics = [#tpu.dimension_semantics<parallel>, #tpu.dimension_semantics<parallel>, #tpu.dimension_semantics<arbitrary>], iteration_bounds = array<i64: 2, 1, 1>, scalar_prefetch = 0 : i64, scratch_operands = 3 : i64, tpu.core_type = #tpu.core_type<tc>, window_params = [{transform_indices = @transform_0, window_bounds = array<i64: 1, 4, 8, 8>}, {transform_indices = @transform_1, window_bounds = array<i64: 1, 4, 8, 8>}, {transform_indices = @transform_2, window_bounds = array<i64: 1, 4, 8, 8>}, {transform_indices = @transform_3, window_bounds = array<i64: 1, 4, 8, 8>}]} {
    %c0_i32 = arith.constant 0 : i32
    %0 = arith.cmpi eq, %arg2, %c0_i32 : i32
    %1 = arith.extui %0 : i1 to i32
    %c0_i32_0 = arith.constant 0 : i32
    %2 = arith.cmpi ne, %1, %c0_i32_0 : i32
    scf.if %2 {
      %cst_41 = arith.constant 0xFF800000 : f32
      %54 = vector.broadcast %cst_41 : f32 to vector<4x8x1xf32>
      %c0_42 = arith.constant 0 : index
      %c0_43 = arith.constant 0 : index
      %c0_44 = arith.constant 0 : index
      %55 = vector.load %arg7[%c0_42, %c0_43, %c0_44] : memref<4x8x1xf32, #tpu.memory_space<vmem>>, vector<4x8x1xf32>
      tpu.vector_store %arg7[%c0_42, %c0_43, %c0_44], %54 {strides = array<i32>} : memref<4x8x1xf32, #tpu.memory_space<vmem>>, vector<4x8x1xf32>,
      %cst_45 = arith.constant 0.000000e+00 : f32
      %56 = vector.broadcast %cst_45 : f32 to vector<4x8x1xf32>
      %c0_46 = arith.constant 0 : index
      %c0_47 = arith.constant 0 : index
      %c0_48 = arith.constant 0 : index
      %57 = vector.load %arg8[%c0_46, %c0_47, %c0_48] : memref<4x8x1xf32, #tpu.memory_space<vmem>>, vector<4x8x1xf32>
      tpu.vector_store %arg8[%c0_46, %c0_47, %c0_48], %56 {strides = array<i32>} : memref<4x8x1xf32, #tpu.memory_space<vmem>>, vector<4x8x1xf32>,
      %cst_49 = arith.constant 0.000000e+00 : f32
      %58 = vector.broadcast %cst_49 : f32 to vector<4x8x8xf32>
      %c0_50 = arith.constant 0 : index
      %c0_51 = arith.constant 0 : index
      %c0_52 = arith.constant 0 : index
      %59 = vector.load %arg9[%c0_50, %c0_51, %c0_52] : memref<4x8x8xf32, #tpu.memory_space<vmem>>, vector<4x8x8xf32>
      tpu.vector_store %arg9[%c0_50, %c0_51, %c0_52], %58 {strides = array<i32>} : memref<4x8x8xf32, #tpu.memory_space<vmem>>, vector<4x8x8xf32>,
    } else {
    }
    %c0 = arith.constant 0 : index
    %c0_1 = arith.constant 0 : index
    %c0_2 = arith.constant 0 : index
    %c0_3 = arith.constant 0 : index
    %3 = vector.load %arg3[%c0, %c0_1, %c0_2, %c0_3] : memref<1x4x8x8xf32, #tpu.memory_space<vmem>>, vector<1x4x8x8xf32>
    %4 = vector.shape_cast %3 : vector<1x4x8x8xf32> to vector<4x8x8xf32>
    %c0_4 = arith.constant 0 : index
    %c0_5 = arith.constant 0 : index
    %c0_6 = arith.constant 0 : index
    %c0_7 = arith.constant 0 : index
    %5 = vector.load %arg4[%c0_4, %c0_5, %c0_6, %c0_7] : memref<1x4x8x8xf32, #tpu.memory_space<vmem>>, vector<1x4x8x8xf32>
    %6 = vector.shape_cast %5 : vector<1x4x8x8xf32> to vector<4x8x8xf32>
    %c0_8 = arith.constant 0 : index
    %c0_9 = arith.constant 0 : index
    %c0_10 = arith.constant 0 : index
    %c0_11 = arith.constant 0 : index
    %7 = vector.load %arg5[%c0_8, %c0_9, %c0_10, %c0_11] : memref<1x4x8x8xf32, #tpu.memory_space<vmem>>, vector<1x4x8x8xf32>
    %8 = vector.shape_cast %7 : vector<1x4x8x8xf32> to vector<4x8x8xf32>
    %9 = arith.mulf %4, %4 : vector<4x8x8xf32>
    %cst = arith.constant dense<0.000000e+00> : vector<4x8xf32>
    %10 = vector.multi_reduction <add>, %9, %cst [2] : vector<4x8x8xf32> to vector<4x8xf32>
    %11 = vector.shape_cast %10 : vector<4x8xf32> to vector<4x8x1xf32>
    %12 = arith.mulf %6, %6 : vector<4x8x8xf32>
    %cst_12 = arith.constant dense<0.000000e+00> : vector<4x8xf32>
    %13 = vector.multi_reduction <add>, %12, %cst_12 [2] : vector<4x8x8xf32> to vector<4x8xf32>
    %14 = vector.shape_cast %13 : vector<4x8xf32> to vector<4x1x8xf32>
    %cst_13 = arith.constant dense<0.000000e+00> : vector<4x8x8xf32>
    %15 = tpu.matmul %4, %6, %cst_13 {dimension_numbers = #tpu.dot_dimension_numbers<[2], [2], [1], [1], [0, 0, 0, 1, 1, 1], [0], [0]>} : vector<4x8x8xf32>, vector<4x8x8xf32>, vector<4x8x8xf32> -> vector<4x8x8xf32>
    %16 = vector.broadcast %11 : vector<4x8x1xf32> to vector<4x8x8xf32>
    %17 = vector.broadcast %14 : vector<4x1x8xf32> to vector<4x8x8xf32>
    %18 = arith.addf %16, %17 : vector<4x8x8xf32>
    %cst_14 = arith.constant 2.000000e+00 : f32
    %19 = vector.broadcast %cst_14 : f32 to vector<4x8x8xf32>
    %20 = arith.mulf %19, %15 : vector<4x8x8xf32>
    %21 = arith.subf %18, %20 : vector<4x8x8xf32>
    %cst_15 = arith.constant 0.000000e+00 : f32
    %22 = vector.broadcast %cst_15 : f32 to vector<4x8x8xf32>
    %23 = arith.maximumf %21, %22 : vector<4x8x8xf32>
    %cst_16 = arith.constant 8.000000e-18 : f32
    %24 = vector.broadcast %cst_16 : f32 to vector<4x8x8xf32>
    %25 = arith.addf %23, %24 : vector<4x8x8xf32>
    %26 = math.rsqrt %25 : vector<4x8x8xf32>
    %cst_17 = arith.constant 2.82842708 : f32
    %27 = vector.broadcast %cst_17 : f32 to vector<4x8x8xf32>
    %28 = arith.mulf %27, %26 : vector<4x8x8xf32>
    %c0_18 = arith.constant 0 : index
    %c0_19 = arith.constant 0 : index
    %c0_20 = arith.constant 0 : index
    %29 = vector.load %arg7[%c0_18, %c0_19, %c0_20] : memref<4x8x1xf32, #tpu.memory_space<vmem>>, vector<4x8x1xf32>
    %cst_21 = arith.constant dense<0xFF800000> : vector<4x8xf32>
    %30 = vector.multi_reduction <maximumf>, %28, %cst_21 [2] : vector<4x8x8xf32> to vector<4x8xf32>
    %31 = vector.shape_cast %30 : vector<4x8xf32> to vector<4x8x1xf32>
    %32 = arith.maximumf %29, %31 : vector<4x8x1xf32>
    %33 = arith.subf %29, %32 : vector<4x8x1xf32>
    %34 = math.exp %33 : vector<4x8x1xf32>
    %35 = vector.broadcast %32 : vector<4x8x1xf32> to vector<4x8x8xf32>
    %36 = arith.subf %28, %35 : vector<4x8x8xf32>
    %37 = math.exp %36 : vector<4x8x8xf32>
    %c0_22 = arith.constant 0 : index
    %c0_23 = arith.constant 0 : index
    %c0_24 = arith.constant 0 : index
    %38 = vector.load %arg8[%c0_22, %c0_23, %c0_24] : memref<4x8x1xf32, #tpu.memory_space<vmem>>, vector<4x8x1xf32>
    %39 = arith.mulf %34, %38 : vector<4x8x1xf32>
    %cst_25 = arith.constant dense<0.000000e+00> : vector<4x8xf32>
    %40 = vector.multi_reduction <add>, %37, %cst_25 [2] : vector<4x8x8xf32> to vector<4x8xf32>
    %41 = vector.shape_cast %40 : vector<4x8xf32> to vector<4x8x1xf32>
    %42 = arith.addf %39, %41 : vector<4x8x1xf32>
    %c0_26 = arith.constant 0 : index
    %c0_27 = arith.constant 0 : index
    %c0_28 = arith.constant 0 : index
    %43 = vector.load %arg8[%c0_26, %c0_27, %c0_28] : memref<4x8x1xf32, #tpu.memory_space<vmem>>, vector<4x8x1xf32>
    tpu.vector_store %arg8[%c0_26, %c0_27, %c0_28], %42 {strides = array<i32>} : memref<4x8x1xf32, #tpu.memory_space<vmem>>, vector<4x8x1xf32>,
    %c0_29 = arith.constant 0 : index
    %c0_30 = arith.constant 0 : index
    %c0_31 = arith.constant 0 : index
    %44 = vector.load %arg9[%c0_29, %c0_30, %c0_31] : memref<4x8x8xf32, #tpu.memory_space<vmem>>, vector<4x8x8xf32>
    %45 = vector.broadcast %34 : vector<4x8x1xf32> to vector<4x8x8xf32>
    %46 = arith.mulf %45, %44 : vector<4x8x8xf32>
    %cst_32 = arith.constant dense<0.000000e+00> : vector<4x8x8xf32>
    %47 = tpu.matmul %37, %8, %cst_32 {dimension_numbers = #tpu.dot_dimension_numbers<[2], [1], [1], [2], [0, 0, 0, 1, 1, 2], [0], [0]>} : vector<4x8x8xf32>, vector<4x8x8xf32>, vector<4x8x8xf32> -> vector<4x8x8xf32>
    %48 = arith.addf %46, %47 : vector<4x8x8xf32>
    %c0_33 = arith.constant 0 : index
    %c0_34 = arith.constant 0 : index
    %c0_35 = arith.constant 0 : index
    %49 = vector.load %arg9[%c0_33, %c0_34, %c0_35] : memref<4x8x8xf32, #tpu.memory_space<vmem>>, vector<4x8x8xf32>
    tpu.vector_store %arg9[%c0_33, %c0_34, %c0_35], %48 {strides = array<i32>} : memref<4x8x8xf32, #tpu.memory_space<vmem>>, vector<4x8x8xf32>,
    %c0_36 = arith.constant 0 : index
    %c0_37 = arith.constant 0 : index
    %c0_38 = arith.constant 0 : index
    %50 = vector.load %arg7[%c0_36, %c0_37, %c0_38] : memref<4x8x1xf32, #tpu.memory_space<vmem>>, vector<4x8x1xf32>
    tpu.vector_store %arg7[%c0_36, %c0_37, %c0_38], %32 {strides = array<i32>} : memref<4x8x1xf32, #tpu.memory_space<vmem>>, vector<4x8x1xf32>,
    %c0_i32_39 = arith.constant 0 : i32
    %51 = arith.cmpi eq, %arg2, %c0_i32_39 : i32
    %52 = arith.extui %51 : i1 to i32
    %c0_i32_40 = arith.constant 0 : i32
    %53 = arith.cmpi ne, %52, %c0_i32_40 : i32
    scf.if %53 {
      %c0_41 = arith.constant 0 : index
      %c0_42 = arith.constant 0 : index
      %c0_43 = arith.constant 0 : index
      %54 = vector.load %arg9[%c0_41, %c0_42, %c0_43] : memref<4x8x8xf32, #tpu.memory_space<vmem>>, vector<4x8x8xf32>
      %c0_44 = arith.constant 0 : index
      %c0_45 = arith.constant 0 : index
      %c0_46 = arith.constant 0 : index
      %55 = vector.load %arg8[%c0_44, %c0_45, %c0_46] : memref<4x8x1xf32, #tpu.memory_space<vmem>>, vector<4x8x1xf32>
      %56 = tpu.reciprocal %55 : vector<4x8x1xf32> -> vector<4x8x1xf32>
      %57 = vector.broadcast %56 : vector<4x8x1xf32> to vector<4x8x8xf32>
      %58 = arith.mulf %54, %57 : vector<4x8x8xf32>
      %c0_47 = arith.constant 0 : index
      %c0_48 = arith.constant 0 : index
      %c0_49 = arith.constant 0 : index
      %c0_50 = arith.constant 0 : index
      %59 = vector.load %arg6[%c0_47, %c0_48, %c0_49, %c0_50] : memref<1x4x8x8xf32, #tpu.memory_space<vmem>>, vector<1x4x8x8xf32>
      %60 = vector.shape_cast %59 : vector<1x4x8x8xf32> to vector<4x8x8xf32>
      %61 = vector.shape_cast %58 : vector<4x8x8xf32> to vector<1x4x8x8xf32>
      tpu.vector_store %arg6[%c0_47, %c0_48, %c0_49, %c0_50], %61 {strides = array<i32>} : memref<1x4x8x8xf32, #tpu.memory_space<vmem>>, vector<1x4x8x8xf32>,
    } else {
    }
    return
  }
  func.func @transform_0(%arg0: i32, %arg1: i32, %arg2: i32) -> (i32, i32, i32, i32) {
    %c0_i32 = arith.constant 0 : i32
    %c0_i32_0 = arith.constant 0 : i32
    %c0_i32_1 = arith.constant 0 : i32
    return %arg0, %c0_i32, %arg1, %c0_i32_0 : i32, i32, i32, i32
  }
  func.func @transform_1(%arg0: i32, %arg1: i32, %arg2: i32) -> (i32, i32, i32, i32) {
    %c0_i32 = arith.constant 0 : i32
    %c0_i32_0 = arith.constant 0 : i32
    %c0_i32_1 = arith.constant 0 : i32
    return %arg0, %c0_i32, %arg2, %c0_i32_0 : i32, i32, i32, i32
  }
  func.func @transform_2(%arg0: i32, %arg1: i32, %arg2: i32) -> (i32, i32, i32, i32) {
    %c0_i32 = arith.constant 0 : i32
    %c0_i32_0 = arith.constant 0 : i32
    %c0_i32_1 = arith.constant 0 : i32
    return %arg0, %c0_i32, %arg2, %c0_i32_0 : i32, i32, i32, i32
  }
  func.func @transform_3(%arg0: i32, %arg1: i32, %arg2: i32) -> (i32, i32, i32, i32) {
    %c0_i32 = arith.constant 0 : i32
    %c0_i32_0 = arith.constant 0 : i32
    %c0_i32_1 = arith.constant 0 : i32
    return %arg0, %c0_i32, %arg1, %c0_i32_0 : i32, i32, i32, i32
  }
}

</mosaic_0001>

<llo_original>
// kernel: tpu_custom_call.1
$region0: #{tpu_custom_call.1}
  #allocation0 [shape = 'u32[]', space=smem, size = 0x4, offset = 0x4, fixed_abs, tag = 'smem constant byte address 0x4 - core index']
  #allocation1 [shape = 'u32[72,128]{1,0:T(1,128)}', space=vmem, size = 0x9000, scoped, tag = 'internal scratch']
  #allocation2 [shape = 'f32[4,8,1]{2,1,0:T(8,128)}', space=vmem, size = 0x4000, scoped, tag = 'scratch operand']
  #allocation3 [shape = 'f32[4,8,1]{2,1,0:T(8,128)}', space=vmem, size = 0x4000, scoped, tag = 'scratch operand']
  #allocation4 [shape = 'f32[4,8,8]{2,1,0:T(8,128)}', space=vmem, size = 0x4000, scoped, tag = 'scratch operand']
  %s0 = inlined_call_operand.hbm [shape: f32[2,4,8,8], index: 0, kind: input, shape index: {}]
  %s1 = inlined_call_operand.hbm [shape: f32[2,4,8,8], index: 1, kind: input, shape index: {}]
  %s2 = inlined_call_operand.hbm [shape: f32[2,4,8,8], index: 2, kind: input, shape index: {}]
  %s3 = inlined_call_operand.hbm [shape: f32[2,4,8,8], index: 3, kind: output, shape index: {}]
  %s4 = sld [smem:[#allocation0]]
  $region65: #{tpu_custom_call.1} parent=0
    _
  %s6 = ssub.s32 1, %s4
  %s7 = scalar_select 0, %s6, %s4
  $region1: #{tpu_custom_call.1} parent=0
    #allocation5 [shape = 'u8[32768]{0}', space=vmem, size = 0x8000, scoped, tag = 'input window, operand 0']
    #allocation6 [shape = 's32[2]{0}', space=sflag, size = 0x8, scoped, tag = 'scoped memory for tpu_custom_call.1']
    #allocation7 [shape = 's32[2]{0}', space=sflag, size = 0x8, scoped, tag = 'scoped memory for tpu_custom_call.1']
    #allocation8 [shape = 'u8[32768]{0}', space=vmem, size = 0x8000, scoped, tag = 'input window, operand 1']
    #allocation9 [shape = 's32[2]{0}', space=sflag, size = 0x8, scoped, tag = 'scoped memory for tpu_custom_call.1']
    #allocation10 [shape = 'u8[32768]{0}', space=vmem, size = 0x8000, scoped, tag = 'input window, operand 2']
    #allocation11 [shape = 'u8[32768]{0}', space=vmem, size = 0x8000, scoped, tag = 'output window, operand 0']
    %8 = vsyncpa [#allocation6], 0
    %s9 = scalar_lea.sflag [#allocation6], 1
    %10 = vsyncpa %s9, 0
    %11 = vsyncpa [#allocation9], 0
    %s12 = scalar_lea.sflag [#allocation9], 1
    %13 = vsyncpa %s12, 0
    %14 = vsyncpa [#allocation7], 0
    %s15 = scalar_lea.sflag [#allocation7], 1
    %16 = vsyncpa %s15, 0
    loop: start=0, step=1, limit=4
    $region2: #{tpu_custom_call.1} parent=1 // loop_pre_header
      _
    $region3: #{tpu_custom_call.1} parent=1 // loop_header
      %s18 = sphi 0, %s22
      %p19 = scmp.ge.s32.totalorder %s18, 4
      %s25 = sphi 0, %s44
      %s26 = sphi 0, %s40
      %s27 = sphi 0, %s36
      %s28 = sphi 0, %s25
      %s29 = sphi 0, %s26
      %s30 = sphi 0, %s27
      %s31 = sphi 0, %s28
      %s32 = sphi 0, %s29
      %s33 = sphi 0, %s30
      %s49 = sphi 0, %s51
      %s52 = sphi 0, %s49
      %s53 = sphi 0, %s52
      %s69 = sphi 0, %s53
      %s77 = sphi 0, %s79
      %s80 = sphi 0, %s77
      %s81 = sphi 0, %s80
      %s97 = sphi 0, %s81
      %s105 = sphi 0, %s107
      %s108 = sphi 0, %s105
      %s109 = sphi 0, %s108
      %s125 = sphi 0, %s109
      %s133 = sphi 0, %s135
      %s136 = sphi 0, %s133
      %s137 = sphi 0, %s136
      %s153 = sphi 0, %s137
    $region4: #{tpu_custom_call.1} parent=1 // loop_header_branch
      %21 = sbr.rel (%p19) target = $region8
    $region5: #{tpu_custom_call.1} parent=1 // loop_body
      %s23 = ssub.s32 %s18, 1
      %s24 = ssub.s32 %s18, 2
      %s34 = sadd.s32 1, %s27
      %p35 = scmp.ge.s32.totalorder %s34, 1
      %s36 = scalar_select %p35, 0, %s34
      %s37 = sadd.s32 1, %s26
      %s38 = scalar_select %p35, %s37, %s26
      %p39 = scmp.ge.s32.totalorder %s38, 1
      %s40 = scalar_select %p39, 0, %s38
      %s41 = sadd.s32 1, %s25
      %s42 = scalar_select %p39, %s41, %s25
      %p43 = scmp.ge.s32.totalorder %s42, 2
      %s44 = scalar_select %p43, 0, %s42
      %s45 = ssub.s32 %s25, %s44
      %s46 = ssub.s32 %s26, %s40
      %s47 = sor.u32 %s45, %s46
      %p48 = scmp.eq.s32.totalorder %s47, 0
      %s50 = sadd.s32 %s49, 1
      %s51 = scalar_select %p48, %s49, %s50
      %p54 = pneg %p48
      %p55 = scmp.eq.s32.totalorder %s18, 1
      %p56 = por %p54, %p55
      %p57 = scmp.ne.s32.totalorder %s49, %s52
      %p58 = scmp.eq.s32.totalorder %s18, 0
      %p59 = por %p57, %p58
      %p60 = scmp.ne.s32.totalorder %s49, %s52
      %p61 = scmp.eq.s32.totalorder %s23, 1
      %p62 = por %p60, %p61
      %p63 = scmp.ne.s32.totalorder %s52, %s53
      %p64 = scmp.eq.s32.totalorder %s23, 0
      %p65 = por %p63, %p64
      %p66 = scmp.ne.s32.totalorder %s52, %s53
      %p67 = scmp.eq.s32.totalorder %s24, 1
      %p68 = por %p66, %p67
      %p70 = scmp.ne.s32.totalorder %s53, %s69
      %p71 = scmp.eq.s32.totalorder %s24, 0
      %p72 = por %p70, %p71
      %s73 = ssub.s32 %s25, %s44
      %s74 = ssub.s32 %s27, %s36
      %s75 = sor.u32 %s73, %s74
      %p76 = scmp.eq.s32.totalorder %s75, 0
      %s78 = sadd.s32 %s77, 1
      %s79 = scalar_select %p76, %s77, %s78
      %p82 = pneg %p76
      %p83 = scmp.eq.s32.totalorder %s18, 1
      %p84 = por %p82, %p83
      %p85 = scmp.ne.s32.totalorder %s77, %s80
      %p86 = scmp.eq.s32.totalorder %s18, 0
      %p87 = por %p85, %p86
      %p88 = scmp.ne.s32.totalorder %s77, %s80
      %p89 = scmp.eq.s32.totalorder %s23, 1
      %p90 = por %p88, %p89
      %p91 = scmp.ne.s32.totalorder %s80, %s81
      %p92 = scmp.eq.s32.totalorder %s23, 0
      %p93 = por %p91, %p92
      %p94 = scmp.ne.s32.totalorder %s80, %s81
      %p95 = scmp.eq.s32.totalorder %s24, 1
      %p96 = por %p94, %p95
      %p98 = scmp.ne.s32.totalorder %s81, %s97
      %p99 = scmp.eq.s32.totalorder %s24, 0
      %p100 = por %p98, %p99
      %s101 = ssub.s32 %s25, %s44
      %s102 = ssub.s32 %s27, %s36
      %s103 = sor.u32 %s101, %s102
      %p104 = scmp.eq.s32.totalorder %s103, 0
      %s106 = sadd.s32 %s105, 1
      %s107 = scalar_select %p104, %s105, %s106
      %p110 = pneg %p104
      %p111 = scmp.eq.s32.totalorder %s18, 1
      %p112 = por %p110, %p111
      %p113 = scmp.ne.s32.totalorder %s105, %s108
      %p114 = scmp.eq.s32.totalorder %s18, 0
      %p115 = por %p113, %p114
      %p116 = scmp.ne.s32.totalorder %s105, %s108
      %p117 = scmp.eq.s32.totalorder %s23, 1
      %p118 = por %p116, %p117
      %p119 = scmp.ne.s32.totalorder %s108, %s109
      %p120 = scmp.eq.s32.totalorder %s23, 0
      %p121 = por %p119, %p120
      %p122 = scmp.ne.s32.totalorder %s108, %s109
      %p123 = scmp.eq.s32.totalorder %s24, 1
      %p124 = por %p122, %p123
      %p126 = scmp.ne.s32.totalorder %s109, %s125
      %p127 = scmp.eq.s32.totalorder %s24, 0
      %p128 = por %p126, %p127
      %s129 = ssub.s32 %s25, %s44
      %s130 = ssub.s32 %s26, %s40
      %s131 = sor.u32 %s129, %s130
      %p132 = scmp.eq.s32.totalorder %s131, 0
      %s134 = sadd.s32 %s133, 1
      %s135 = scalar_select %p132, %s133, %s134
      %p138 = pneg %p132
      %p139 = scmp.eq.s32.totalorder %s18, 1
      %p140 = por %p138, %p139
      %p141 = scmp.ne.s32.totalorder %s133, %s136
      %p142 = scmp.eq.s32.totalorder %s18, 0
      %p143 = por %p141, %p142
      %p144 = scmp.ne.s32.totalorder %s133, %s136
      %p145 = scmp.eq.s32.totalorder %s23, 1
      %p146 = por %p144, %p145
      %p147 = scmp.ne.s32.totalorder %s136, %s137
      %p148 = scmp.eq.s32.totalorder %s23, 0
      %p149 = por %p147, %p148
      %p150 = scmp.ne.s32.totalorder %s136, %s137
      %p151 = scmp.eq.s32.totalorder %s24, 1
      %p152 = por %p150, %p151
      %p154 = scmp.ne.s32.totalorder %s137, %s153
      %p155 = scmp.eq.s32.totalorder %s24, 0
      %p156 = por %p154, %p155
      %p157 = scmp.le.s32.totalorder 1, %s18
      %p158 = scmp.lt.s32.totalorder %s18, 3
      %p159 = pnand %p157, %p158
      %p160 = pneg %p159
      // Predicated region
      $region9: #{tpu_custom_call.1} parent=5 // pred_check
        _
      $region10: #{tpu_custom_call.1} parent=5 // pred_check_branch
        %162 = sbr.rel (%p159) target = $region12
      $region11: #{tpu_custom_call.1} parent=5 // pred_region
        %s163 = ssub.s32 %s18, 1
      $region12: #{tpu_custom_call.1} parent=5 // pred_fallthru
        _
      %p164 = scmp.lt.s32.totalorder %s18, 2
      // Predicated region
      $region13: #{tpu_custom_call.1} parent=5 // pred_check
        %p165 = pneg %p164
      $region14: #{tpu_custom_call.1} parent=5 // pred_check_branch
        %167 = sbr.rel (%p165) target = $region16
      $region15: #{tpu_custom_call.1} parent=5 // pred_region
        // Predicated region
        $region17: #{tpu_custom_call.1} parent=15 // pred_check
          %p168 = pneg %p59
        $region18: #{tpu_custom_call.1} parent=15 // pred_check_branch
          %170 = sbr.rel (%p168) target = $region20
        $region19: #{tpu_custom_call.1} parent=15 // pred_region
          %s171 = sand.u32 %s49, 1
          %s172 = scalar_lea.sflag [#allocation6], %s171
          %s173 = sand.u32 %s49, 1
          %s174 = smul.addr %s173, 32
          %s175 = scalar_lea.vmem [#allocation5], %s174
          %177 = vsyncadd %s172, 0
          %s178 = smul.addr %s25, 4
          %s179 = sadd.s32 %s26, %s178
          %s180 = smul.addr %s179, 8
          %s181 = scalar_lea.hbm %s0, %s180
          %s182 = sshll.u32 %s181, 4
          %s183 = int_to_ptr.hbm [resolvable:$true] %s182
          %s184 = sshll.u32 %s175, 4
          %s185 = int_to_ptr.vmem [resolvable:$true] %s184
          %190 = dma.hbm_to_vmem [thread:$0]  %s183, 512, %s185, %s172, 128, 128, 8
        $region20: #{tpu_custom_call.1} parent=15 // pred_fallthru
          _
        // Predicated region
        $region21: #{tpu_custom_call.1} parent=15 // pred_check
          %p191 = pneg %p87
        $region22: #{tpu_custom_call.1} parent=15 // pred_check_branch
          %193 = sbr.rel (%p191) target = $region24
        $region23: #{tpu_custom_call.1} parent=15 // pred_region
          %s194 = sand.u32 %s18, 1
          %s195 = scalar_lea.sflag [#allocation9], %s194
          %s196 = sand.u32 %s77, 1
          %s197 = smul.addr %s196, 32
          %s198 = scalar_lea.vmem [#allocation8], %s197
          %200 = vsyncadd %s195, 0
          %s201 = smul.addr %s25, 4
          %s202 = sadd.s32 %s27, %s201
          %s203 = smul.addr %s202, 8
          %s204 = scalar_lea.hbm %s1, %s203
          %s205 = sshll.u32 %s204, 4
          %s206 = int_to_ptr.hbm [resolvable:$true] %s205
          %s207 = sshll.u32 %s198, 4
          %s208 = int_to_ptr.vmem [resolvable:$true] %s207
          %213 = dma.hbm_to_vmem [thread:$0]  %s206, 512, %s208, %s195, 128, 128, 8
        $region24: #{tpu_custom_call.1} parent=15 // pred_fallthru
          _
        // Predicated region
        $region25: #{tpu_custom_call.1} parent=15 // pred_check
          %p214 = pneg %p115
        $region26: #{tpu_custom_call.1} parent=15 // pred_check_branch
          %216 = sbr.rel (%p214) target = $region28
        $region27: #{tpu_custom_call.1} parent=15 // pred_region
          %s217 = sand.u32 %s18, 1
          %s218 = scalar_lea.sflag [#allocation9], %s217
          %s219 = sand.u32 %s105, 1
          %s220 = smul.addr %s219, 32
          %s221 = scalar_lea.vmem [#allocation10], %s220
          %223 = vsyncadd %s218, 0
          %s224 = smul.addr %s25, 4
          %s225 = sadd.s32 %s27, %s224
          %s226 = smul.addr %s225, 8
          %s227 = scalar_lea.hbm %s2, %s226
          %s228 = sshll.u32 %s227, 4
          %s229 = int_to_ptr.hbm [resolvable:$true] %s228
          %s230 = sshll.u32 %s221, 4
          %s231 = int_to_ptr.vmem [resolvable:$true] %s230
          %236 = dma.hbm_to_vmem [thread:$0]  %s229, 512, %s231, %s218, 128, 128, 8
        $region28: #{tpu_custom_call.1} parent=15 // pred_fallthru
          _
      $region16: #{tpu_custom_call.1} parent=5 // pred_fallthru
        _
      %p237 = scmp.le.s32.totalorder 1, %s18
      %p238 = scmp.lt.s32.totalorder %s18, 3
      %p239 = pnand %p237, %p238
      %p240 = pneg %p239
      // Predicated region
      $region29: #{tpu_custom_call.1} parent=5 // pred_check
        _
      $region30: #{tpu_custom_call.1} parent=5 // pred_check_branch
        %242 = sbr.rel (%p239) target = $region32
      $region31: #{tpu_custom_call.1} parent=5 // pred_region
        %s243 = ssub.s32 %s18, 1
        %s244 = sand.u32 %s52, 1
        %s245 = scalar_lea.sflag [#allocation6], %s244
        %s246 = sand.u32 %s52, 1
        %s247 = smul.addr %s246, 32
        %s248 = scalar_lea.vmem [#allocation5], %s247
        // Predicated region
        $region33: #{tpu_custom_call.1} parent=31 // pred_check
          %p249 = pneg %p65
        $region34: #{tpu_custom_call.1} parent=31 // pred_check_branch
          %251 = sbr.rel (%p249) target = $region36
        $region35: #{tpu_custom_call.1} parent=31 // pred_region
          %253 = dma.done %s245, 512
        $region36: #{tpu_custom_call.1} parent=31 // pred_fallthru
          _
        %s254 = sand.u32 %s23, 1
        %s255 = scalar_lea.sflag [#allocation9], %s254
        %s256 = sand.u32 %s80, 1
        %s257 = smul.addr %s256, 32
        %s258 = scalar_lea.vmem [#allocation8], %s257
        // Predicated region
        $region37: #{tpu_custom_call.1} parent=31 // pred_check
          %p259 = pneg %p93
        $region38: #{tpu_custom_call.1} parent=31 // pred_check_branch
          %261 = sbr.rel (%p259) target = $region40
        $region39: #{tpu_custom_call.1} parent=31 // pred_region
          %263 = dma.done %s255, 512
        $region40: #{tpu_custom_call.1} parent=31 // pred_fallthru
          _
        %s264 = sand.u32 %s23, 1
        %s265 = scalar_lea.sflag [#allocation9], %s264
        %s266 = sand.u32 %s108, 1
        %s267 = smul.addr %s266, 32
        %s268 = scalar_lea.vmem [#allocation10], %s267
        // Predicated region
        $region41: #{tpu_custom_call.1} parent=31 // pred_check
          %p269 = pneg %p121
        $region42: #{tpu_custom_call.1} parent=31 // pred_check_branch
          %271 = sbr.rel (%p269) target = $region44
        $region43: #{tpu_custom_call.1} parent=31 // pred_region
          %273 = dma.done %s265, 512
        $region44: #{tpu_custom_call.1} parent=31 // pred_fallthru
          _
        %s274 = sand.u32 %s52, 1
        %s275 = scalar_lea.sflag [#allocation6], %s274
        %s276 = sand.u32 %s52, 1
        %s277 = smul.addr %s276, 32
        %s278 = scalar_lea.vmem [#allocation5], %s277
        %p279 = pneg %p65
        %p280 = pneg %p62
        %s281 = sand.u32 %s23, 1
        %s282 = scalar_lea.sflag [#allocation9], %s281
        %s283 = sand.u32 %s80, 1
        %s284 = smul.addr %s283, 32
        %s285 = scalar_lea.vmem [#allocation8], %s284
        %p286 = pneg %p93
        %p287 = pneg %p90
        %s288 = sand.u32 %s23, 1
        %s289 = scalar_lea.sflag [#allocation9], %s288
        %s290 = sand.u32 %s108, 1
        %s291 = smul.addr %s290, 32
        %s292 = scalar_lea.vmem [#allocation10], %s291
        %p293 = pneg %p121
        %p294 = pneg %p118
        %p295 = pneg %p149
        %p296 = pneg %p146
        %s297 = sand.u32 %s136, 1
        %s298 = scalar_lea.sflag [#allocation7], %s297
        %s299 = sand.u32 %s136, 1
        %s300 = smul.addr %s299, 32
        %s301 = scalar_lea.vmem [#allocation11], %s300
        %p302 = scmp.eq.s32.totalorder %s30, 0
        // Predicated region
        $region45: #{tpu_custom_call.1} parent=31 // pred_check
          %p303 = pneg %p302
        $region46: #{tpu_custom_call.1} parent=31 // pred_check_branch
          %305 = sbr.rel (%p303) target = $region48
        $region47: #{tpu_custom_call.1} parent=31 // pred_region
          %vm306 = vcmask 7168
          %307 = vst.msk [vmem:[#allocation2] sm:$0xff] %vm306, -inf
          %308 = vst.msk [vmem:[#allocation2 + $0x8] sm:$0xff] %vm306, -inf
          %309 = vst.msk [vmem:[#allocation2 + $0x10] sm:$0xff] %vm306, -inf
          %310 = vst.msk [vmem:[#allocation2 + $0x18] sm:$0xff] %vm306, -inf
          %311 = vst.msk [vmem:[#allocation3] sm:$0xff] %vm306, 0.0
          %312 = vst.msk [vmem:[#allocation3 + $0x8] sm:$0xff] %vm306, 0.0
          %313 = vst.msk [vmem:[#allocation3 + $0x10] sm:$0xff] %vm306, 0.0
          %314 = vst.msk [vmem:[#allocation3 + $0x18] sm:$0xff] %vm306, 0.0
          %vm315 = vcmask 64512
          %316 = vst.msk [vmem:[#allocation4] sm:$0xff] %vm315, 0.0
          %317 = vst.msk [vmem:[#allocation4 + $0x8] sm:$0xff] %vm315, 0.0
          %318 = vst.msk [vmem:[#allocation4 + $0x10] sm:$0xff] %vm315, 0.0
          %319 = vst.msk [vmem:[#allocation4 + $0x18] sm:$0xff] %vm315, 0.0
        $region48: #{tpu_custom_call.1} parent=31 // pred_fallthru
          _
        %v320 = vld [vmem:[%s248] sm:$0xff]
        %v321 = vld [vmem:[%s248 + $0x8] sm:$0xff]
        %v322 = vld [vmem:[%s248 + $0x10] sm:$0xff]
        %v323 = vld [vmem:[%s248 + $0x18] sm:$0xff]
        %v324 = vld [vmem:[%s258] sm:$0xff]
        %v325 = vld [vmem:[%s258 + $0x8] sm:$0xff]
        %v326 = vld [vmem:[%s258 + $0x10] sm:$0xff]
        %v327 = vld [vmem:[%s258 + $0x18] sm:$0xff]
        %v328 = vld [vmem:[%s268] sm:$0xff]
        %v329 = vld [vmem:[%s268 + $0x8] sm:$0xff]
        %v330 = vld [vmem:[%s268 + $0x10] sm:$0xff]
        %v331 = vld [vmem:[%s268 + $0x18] sm:$0xff]
        %v332 = vmul.f32 %v320, %v320
        %v333 = vmul.f32 %v321, %v321
        %v334 = vmul.f32 %v322, %v322
        %v335 = vmul.f32 %v323, %v323
        %vm336 = vcmask 64512
        %v337 = vsel %vm336, %v332, 0.0
        %338 = vadd.xlane.f32.xlu0 %v337
        %v339 = vpop.xlane.xlu0 %338
        %v340 = vsel %vm336, %v333, 0.0
        %341 = vadd.xlane.f32.xlu0 %v340
        %v342 = vpop.xlane.xlu0 %341
        %v343 = vsel %vm336, %v334, 0.0
        %344 = vadd.xlane.f32.xlu0 %v343
        %v345 = vpop.xlane.xlu0 %344
        %v346 = vsel %vm336, %v335, 0.0
        %347 = vadd.xlane.f32.xlu0 %v346
        %v348 = vpop.xlane.xlu0 %347
        %v349 = vmul.f32 %v324, %v324
        %v350 = vmul.f32 %v325, %v325
        %v351 = vmul.f32 %v326, %v326
        %v352 = vmul.f32 %v327, %v327
        %v353 = vsel %vm336, %v349, 0.0
        %354 = vadd.xlane.f32.xlu0 %v353
        %v355 = vpop.xlane.xlu0 %354
        %v356 = vsel %vm336, %v350, 0.0
        %357 = vadd.xlane.f32.xlu0 %v356
        %v358 = vpop.xlane.xlu0 %357
        %v359 = vsel %vm336, %v351, 0.0
        %360 = vadd.xlane.f32.xlu0 %v359
        %v361 = vpop.xlane.xlu0 %360
        %v362 = vsel %vm336, %v352, 0.0
        %363 = vadd.xlane.f32.xlu0 %v362
        %v364 = vpop.xlane.xlu0 %363
        %v366 = vsel %vm336, %v320, 0
        %v369 = vsel %vm336, %v324, 0
        %371 = vmatpush.xpose.msra.mxu0 0.0
        %372 = vmatpush.xpose.msra.mxu0 0.0
        %373 = vmatpush.xpose.msra.mxu0 0.0
        %374 = vmatpush.xpose.msra.mxu0 0.0
        %375 = vmatpush.xpose.msra.mxu0 0.0
        %376 = vmatpush.xpose.msra.mxu0 0.0
        %377 = vmatpush.xpose.msra.mxu0 0.0
        %378 = vmatpush.xpose.msra.mxu0 0.0
        %379 = vmatpush.xpose.msra.mxu0 0.0
        %380 = vmatpush.xpose.msra.mxu0 0.0
        %381 = vmatpush.xpose.msra.mxu0 0.0
        %382 = vmatpush.xpose.msra.mxu0 0.0
        %383 = vmatpush.xpose.msra.mxu0 0.0
        %384 = vmatpush.xpose.msra.mxu0 0.0
        %385 = vmatpush.xpose.msra.mxu0 0.0
        %386 = vmatpush.xpose.msra.mxu0 %v369
        %387 = vmatmul.f32.gmra.mxu0 %v366
        %v388 = vpop.f32.mrf.mxu0
        %v389 = vadd.f32 0.0, %v388
        %390 = vdwg.mxu0
        %v392 = vsel %vm336, %v321, 0
        %v395 = vsel %vm336, %v325, 0
        %397 = vmatpush.xpose.msra.mxu0 0.0
        %398 = vmatpush.xpose.msra.mxu0 0.0
        %399 = vmatpush.xpose.msra.mxu0 0.0
        %400 = vmatpush.xpose.msra.mxu0 0.0
        %401 = vmatpush.xpose.msra.mxu0 0.0
        %402 = vmatpush.xpose.msra.mxu0 0.0
        %403 = vmatpush.xpose.msra.mxu0 0.0
        %404 = vmatpush.xpose.msra.mxu0 0.0
        %405 = vmatpush.xpose.msra.mxu0 0.0
        %406 = vmatpush.xpose.msra.mxu0 0.0
        %407 = vmatpush.xpose.msra.mxu0 0.0
        %408 = vmatpush.xpose.msra.mxu0 0.0
        %409 = vmatpush.xpose.msra.mxu0 0.0
        %410 = vmatpush.xpose.msra.mxu0 0.0
        %411 = vmatpush.xpose.msra.mxu0 0.0
        %412 = vmatpush.xpose.msra.mxu0 %v395
        %413 = vmatmul.f32.gmra.mxu0 %v392
        %v414 = vpop.f32.mrf.mxu0
        %v415 = vadd.f32 0.0, %v414
        %416 = vdwg.mxu0
        %v418 = vsel %vm336, %v322, 0
        %v421 = vsel %vm336, %v326, 0
        %423 = vmatpush.xpose.msra.mxu0 0.0
        %424 = vmatpush.xpose.msra.mxu0 0.0
        %425 = vmatpush.xpose.msra.mxu0 0.0
        %426 = vmatpush.xpose.msra.mxu0 0.0
        %427 = vmatpush.xpose.msra.mxu0 0.0
        %428 = vmatpush.xpose.msra.mxu0 0.0
        %429 = vmatpush.xpose.msra.mxu0 0.0
        %430 = vmatpush.xpose.msra.mxu0 0.0
        %431 = vmatpush.xpose.msra.mxu0 0.0
        %432 = vmatpush.xpose.msra.mxu0 0.0
        %433 = vmatpush.xpose.msra.mxu0 0.0
        %434 = vmatpush.xpose.msra.mxu0 0.0
        %435 = vmatpush.xpose.msra.mxu0 0.0
        %436 = vmatpush.xpose.msra.mxu0 0.0
        %437 = vmatpush.xpose.msra.mxu0 0.0
        %438 = vmatpush.xpose.msra.mxu0 %v421
        %439 = vmatmul.f32.gmra.mxu0 %v418
        %v440 = vpop.f32.mrf.mxu0
        %v441 = vadd.f32 0.0, %v440
        %442 = vdwg.mxu0
        %v444 = vsel %vm336, %v323, 0
        %v447 = vsel %vm336, %v327, 0
        %449 = vmatpush.xpose.msra.mxu0 0.0
        %450 = vmatpush.xpose.msra.mxu0 0.0
        %451 = vmatpush.xpose.msra.mxu0 0.0
        %452 = vmatpush.xpose.msra.mxu0 0.0
        %453 = vmatpush.xpose.msra.mxu0 0.0
        %454 = vmatpush.xpose.msra.mxu0 0.0
        %455 = vmatpush.xpose.msra.mxu0 0.0
        %456 = vmatpush.xpose.msra.mxu0 0.0
        %457 = vmatpush.xpose.msra.mxu0 0.0
        %458 = vmatpush.xpose.msra.mxu0 0.0
        %459 = vmatpush.xpose.msra.mxu0 0.0
        %460 = vmatpush.xpose.msra.mxu0 0.0
        %461 = vmatpush.xpose.msra.mxu0 0.0
        %462 = vmatpush.xpose.msra.mxu0 0.0
        %463 = vmatpush.xpose.msra.mxu0 0.0
        %464 = vmatpush.xpose.msra.mxu0 %v447
        %465 = vmatmul.f32.gmra.mxu0 %v444
        %v466 = vpop.f32.mrf.mxu0
        %v467 = vadd.f32 0.0, %v466
        %468 = vdwg.mxu0
        %v473 = vlaneseq
        %v474 = vand.u32 %v473, 127
        %v475 = vperm.slane %v355, %v474
        %v476 = vperm.slane %v358, %v474
        %v477 = vperm.slane %v361, %v474
        %v478 = vperm.slane %v364, %v474
        %vm479 = vcmask 1042434
        %v480 = vsel %vm479, %v475, %v475
        %vm481 = vcmask 1043459
        %v482 = vsel %vm481, %v475, %v480
        %vm483 = vcmask 1044484
        %v484 = vsel %vm483, %v475, %v482
        %vm485 = vcmask 1045509
        %v486 = vsel %vm485, %v475, %v484
        %vm487 = vcmask 1046534
        %v488 = vsel %vm487, %v475, %v486
        %vm489 = vcmask 1047559
        %v490 = vsel %vm489, %v475, %v488
        %v491 = vsel %vm479, %v476, %v476
        %v492 = vsel %vm481, %v476, %v491
        %v493 = vsel %vm483, %v476, %v492
        %v494 = vsel %vm485, %v476, %v493
        %v495 = vsel %vm487, %v476, %v494
        %v496 = vsel %vm489, %v476, %v495
        %v497 = vsel %vm479, %v477, %v477
        %v498 = vsel %vm481, %v477, %v497
        %v499 = vsel %vm483, %v477, %v498
        %v500 = vsel %vm485, %v477, %v499
        %v501 = vsel %vm487, %v477, %v500
        %v502 = vsel %vm489, %v477, %v501
        %v503 = vsel %vm479, %v478, %v478
        %v504 = vsel %vm481, %v478, %v503
        %v505 = vsel %vm483, %v478, %v504
        %v506 = vsel %vm485, %v478, %v505
        %v507 = vsel %vm487, %v478, %v506
        %v508 = vsel %vm489, %v478, %v507
        %v513 = vadd.f32 %v339, %v490
        %v514 = vadd.f32 %v342, %v496
        %v515 = vadd.f32 %v345, %v502
        %v516 = vadd.f32 %v348, %v508
        %v517 = vmul.f32 %v389, 2.0
        %v518 = vmul.f32 %v415, 2.0
        %v519 = vmul.f32 %v441, 2.0
        %v520 = vmul.f32 %v467, 2.0
        %v521 = vsub.f32 %v513, %v517
        %v522 = vsub.f32 %v514, %v518
        %v523 = vsub.f32 %v515, %v519
        %v524 = vsub.f32 %v516, %v520
        %v525 = vmax.f32 %v521, 0.0
        %v526 = vmax.f32 %v522, 0.0
        %v527 = vmax.f32 %v523, 0.0
        %v528 = vmax.f32 %v524, 0.0
        %v529 = vadd.f32 %v525, 8e-18
        %v530 = vadd.f32 %v526, 8e-18
        %v531 = vadd.f32 %v527, 8e-18
        %v532 = vadd.f32 %v528, 8e-18
        %v533 = vrsqrt.pop %v529
        %v534 = vmul.f32 %v533, %v529
        %v535 = vmul.f32 %v534, %v533
        %v536 = vmul.f32 0.5, %v535
        %v537 = vsub.f32 1.5, %v536
        %v538 = vmul.f32 %v533, %v537
        %vm539 = vweird.f32 %v529
        %vm540 = vweird.f32 %v533
        %vm541 = vmor %vm539, %vm540
        %v542 = vsel %vm541, %v533, %v538
        %v543 = vrsqrt.pop %v530
        %v544 = vmul.f32 %v543, %v530
        %v545 = vmul.f32 %v544, %v543
        %v546 = vmul.f32 0.5, %v545
        %v547 = vsub.f32 1.5, %v546
        %v548 = vmul.f32 %v543, %v547
        %vm549 = vweird.f32 %v530
        %vm550 = vweird.f32 %v543
        %vm551 = vmor %vm549, %vm550
        %v552 = vsel %vm551, %v543, %v548
        %v553 = vrsqrt.pop %v531
        %v554 = vmul.f32 %v553, %v531
        %v555 = vmul.f32 %v554, %v553
        %v556 = vmul.f32 0.5, %v555
        %v557 = vsub.f32 1.5, %v556
        %v558 = vmul.f32 %v553, %v557
        %vm559 = vweird.f32 %v531
        %vm560 = vweird.f32 %v553
        %vm561 = vmor %vm559, %vm560
        %v562 = vsel %vm561, %v553, %v558
        %v563 = vrsqrt.pop %v532
        %v564 = vmul.f32 %v563, %v532
        %v565 = vmul.f32 %v564, %v563
        %v566 = vmul.f32 0.5, %v565
        %v567 = vsub.f32 1.5, %v566
        %v568 = vmul.f32 %v563, %v567
        %vm569 = vweird.f32 %v532
        %vm570 = vweird.f32 %v563
        %vm571 = vmor %vm569, %vm570
        %v572 = vsel %vm571, %v563, %v568
        %v573 = vmul.f32 %v542, 2.828427
        %v574 = vmul.f32 %v552, 2.828427
        %v575 = vmul.f32 %v562, 2.828427
        %v576 = vmul.f32 %v572, 2.828427
        %v577 = vld [vmem:[#allocation2] sm:$0xff]
        %v578 = vld [vmem:[#allocation2 + $0x8] sm:$0xff]
        %v579 = vld [vmem:[#allocation2 + $0x10] sm:$0xff]
        %v580 = vld [vmem:[#allocation2 + $0x18] sm:$0xff]
        %v581 = vsel %vm336, %v573, -inf
        %582 = vmax.xlane.f32.xlu0 %v581
        %v583 = vpop.xlane.xlu0 %582
        %v584 = vsel %vm336, %v574, -inf
        %585 = vmax.xlane.f32.xlu0 %v584
        %v586 = vpop.xlane.xlu0 %585
        %v587 = vsel %vm336, %v575, -inf
        %588 = vmax.xlane.f32.xlu0 %v587
        %v589 = vpop.xlane.xlu0 %588
        %v590 = vsel %vm336, %v576, -inf
        %591 = vmax.xlane.f32.xlu0 %v590
        %v592 = vpop.xlane.xlu0 %591
        %v593 = vmax.f32 %v577, %v583
        %v594 = vmax.f32 %v578, %v586
        %v595 = vmax.f32 %v579, %v589
        %v596 = vmax.f32 %v580, %v592
        %v597 = vsub.f32 %v577, %v593
        %v598 = vsub.f32 %v578, %v594
        %v599 = vsub.f32 %v579, %v595
        %v600 = vsub.f32 %v580, %v596
        %v601 = vmul.f32 %v597, 1.442695
        %v602 = vpow.pop %v601
        %v603 = vmul.f32 %v598, 1.442695
        %v604 = vpow.pop %v603
        %v605 = vmul.f32 %v599, 1.442695
        %v606 = vpow.pop %v605
        %v607 = vmul.f32 %v600, 1.442695
        %v608 = vpow.pop %v607
        %610 = vset.pattern.permute.xlu0 0
        %611 = vperm.xlu0 %610, %v593
        %v612 = vpop.permute.xlu0 %611
        %615 = vset.pattern.permute.xlu0 0
        %616 = vperm.xlu0 %615, %v594
        %v617 = vpop.permute.xlu0 %616
        %620 = vset.pattern.permute.xlu0 0
        %621 = vperm.xlu0 %620, %v595
        %v622 = vpop.permute.xlu0 %621
        %625 = vset.pattern.permute.xlu0 0
        %626 = vperm.xlu0 %625, %v596
        %v627 = vpop.permute.xlu0 %626
        %v629 = vsub.f32 %v573, %v612
        %v630 = vsub.f32 %v574, %v617
        %v631 = vsub.f32 %v575, %v622
        %v632 = vsub.f32 %v576, %v627
        %v633 = vmul.f32 %v629, 1.442695
        %v634 = vpow.pop %v633
        %v635 = vmul.f32 %v630, 1.442695
        %v636 = vpow.pop %v635
        %v637 = vmul.f32 %v631, 1.442695
        %v638 = vpow.pop %v637
        %v639 = vmul.f32 %v632, 1.442695
        %v640 = vpow.pop %v639
        %v641 = vld [vmem:[#allocation3] sm:$0xff]
        %v642 = vld [vmem:[#allocation3 + $0x8] sm:$0xff]
        %v643 = vld [vmem:[#allocation3 + $0x10] sm:$0xff]
        %v644 = vld [vmem:[#allocation3 + $0x18] sm:$0xff]
        %v645 = vmul.f32 %v602, %v641
        %v646 = vmul.f32 %v604, %v642
        %v647 = vmul.f32 %v606, %v643
        %v648 = vmul.f32 %v608, %v644
        %v649 = vsel %vm336, %v634, 0.0
        %650 = vadd.xlane.f32.xlu0 %v649
        %v651 = vpop.xlane.xlu0 %650
        %v652 = vsel %vm336, %v636, 0.0
        %653 = vadd.xlane.f32.xlu0 %v652
        %v654 = vpop.xlane.xlu0 %653
        %v655 = vsel %vm336, %v638, 0.0
        %656 = vadd.xlane.f32.xlu0 %v655
        %v657 = vpop.xlane.xlu0 %656
        %v658 = vsel %vm336, %v640, 0.0
        %659 = vadd.xlane.f32.xlu0 %v658
        %v660 = vpop.xlane.xlu0 %659
        %v661 = vadd.f32 %v645, %v651
        %v662 = vadd.f32 %v646, %v654
        %v663 = vadd.f32 %v647, %v657
        %v664 = vadd.f32 %v648, %v660
        %vm665 = vcmask 7168
        %666 = vst.msk [vmem:[#allocation3] sm:$0xff] %vm665, %v661
        %667 = vst.msk [vmem:[#allocation3 + $0x8] sm:$0xff] %vm665, %v662
        %668 = vst.msk [vmem:[#allocation3 + $0x10] sm:$0xff] %vm665, %v663
        %669 = vst.msk [vmem:[#allocation3 + $0x18] sm:$0xff] %vm665, %v664
        %v670 = vld [vmem:[#allocation4] sm:$0xff]
        %v671 = vld [vmem:[#allocation4 + $0x8] sm:$0xff]
        %v672 = vld [vmem:[#allocation4 + $0x10] sm:$0xff]
        %v673 = vld [vmem:[#allocation4 + $0x18] sm:$0xff]
        %675 = vset.pattern.permute.xlu0 0
        %676 = vperm.xlu0 %675, %v602
        %v677 = vpop.permute.xlu0 %676
        %680 = vset.pattern.permute.xlu0 0
        %681 = vperm.xlu0 %680, %v604
        %v682 = vpop.permute.xlu0 %681
        %685 = vset.pattern.permute.xlu0 0
        %686 = vperm.xlu0 %685, %v606
        %v687 = vpop.permute.xlu0 %686
        %690 = vset.pattern.permute.xlu0 0
        %691 = vperm.xlu0 %690, %v608
        %v692 = vpop.permute.xlu0 %691
        %v694 = vmul.f32 %v677, %v670
        %v695 = vmul.f32 %v682, %v671
        %v696 = vmul.f32 %v687, %v672
        %v697 = vmul.f32 %v692, %v673
        %v699 = vsel %vm336, %v634, 0
        %701 = vmatpush.msra.mxu0 0.0
        %702 = vmatpush.msra.mxu0 0.0
        %703 = vmatpush.msra.mxu0 0.0
        %704 = vmatpush.msra.mxu0 0.0
        %705 = vmatpush.msra.mxu0 0.0
        %706 = vmatpush.msra.mxu0 0.0
        %707 = vmatpush.msra.mxu0 0.0
        %708 = vmatpush.msra.mxu0 0.0
        %709 = vmatpush.msra.mxu0 0.0
        %710 = vmatpush.msra.mxu0 0.0
        %711 = vmatpush.msra.mxu0 0.0
        %712 = vmatpush.msra.mxu0 0.0
        %713 = vmatpush.msra.mxu0 0.0
        %714 = vmatpush.msra.mxu0 0.0
        %715 = vmatpush.msra.mxu0 0.0
        %716 = vmatpush.msra.mxu0 %v328
        %717 = vmatmul.f32.gmra.mxu0 %v699
        %v718 = vpop.f32.mrf.mxu0
        %v719 = vadd.f32 0.0, %v718
        %720 = vdwg.mxu0
        %v722 = vsel %vm336, %v636, 0
        %724 = vmatpush.msra.mxu0 0.0
        %725 = vmatpush.msra.mxu0 0.0
        %726 = vmatpush.msra.mxu0 0.0
        %727 = vmatpush.msra.mxu0 0.0
        %728 = vmatpush.msra.mxu0 0.0
        %729 = vmatpush.msra.mxu0 0.0
        %730 = vmatpush.msra.mxu0 0.0
        %731 = vmatpush.msra.mxu0 0.0
        %732 = vmatpush.msra.mxu0 0.0
        %733 = vmatpush.msra.mxu0 0.0
        %734 = vmatpush.msra.mxu0 0.0
        %735 = vmatpush.msra.mxu0 0.0
        %736 = vmatpush.msra.mxu0 0.0
        %737 = vmatpush.msra.mxu0 0.0
        %738 = vmatpush.msra.mxu0 0.0
        %739 = vmatpush.msra.mxu0 %v329
        %740 = vmatmul.f32.gmra.mxu0 %v722
        %v741 = vpop.f32.mrf.mxu0
        %v742 = vadd.f32 0.0, %v741
        %743 = vdwg.mxu0
        %v745 = vsel %vm336, %v638, 0
        %747 = vmatpush.msra.mxu0 0.0
        %748 = vmatpush.msra.mxu0 0.0
        %749 = vmatpush.msra.mxu0 0.0
        %750 = vmatpush.msra.mxu0 0.0
        %751 = vmatpush.msra.mxu0 0.0
        %752 = vmatpush.msra.mxu0 0.0
        %753 = vmatpush.msra.mxu0 0.0
        %754 = vmatpush.msra.mxu0 0.0
        %755 = vmatpush.msra.mxu0 0.0
        %756 = vmatpush.msra.mxu0 0.0
        %757 = vmatpush.msra.mxu0 0.0
        %758 = vmatpush.msra.mxu0 0.0
        %759 = vmatpush.msra.mxu0 0.0
        %760 = vmatpush.msra.mxu0 0.0
        %761 = vmatpush.msra.mxu0 0.0
        %762 = vmatpush.msra.mxu0 %v330
        %763 = vmatmul.f32.gmra.mxu0 %v745
        %v764 = vpop.f32.mrf.mxu0
        %v765 = vadd.f32 0.0, %v764
        %766 = vdwg.mxu0
        %v768 = vsel %vm336, %v640, 0
        %770 = vmatpush.msra.mxu0 0.0
        %771 = vmatpush.msra.mxu0 0.0
        %772 = vmatpush.msra.mxu0 0.0
        %773 = vmatpush.msra.mxu0 0.0
        %774 = vmatpush.msra.mxu0 0.0
        %775 = vmatpush.msra.mxu0 0.0
        %776 = vmatpush.msra.mxu0 0.0
        %777 = vmatpush.msra.mxu0 0.0
        %778 = vmatpush.msra.mxu0 0.0
        %779 = vmatpush.msra.mxu0 0.0
        %780 = vmatpush.msra.mxu0 0.0
        %781 = vmatpush.msra.mxu0 0.0
        %782 = vmatpush.msra.mxu0 0.0
        %783 = vmatpush.msra.mxu0 0.0
        %784 = vmatpush.msra.mxu0 0.0
        %785 = vmatpush.msra.mxu0 %v331
        %786 = vmatmul.f32.gmra.mxu0 %v768
        %v787 = vpop.f32.mrf.mxu0
        %v788 = vadd.f32 0.0, %v787
        %789 = vdwg.mxu0
        %v790 = vadd.f32 %v694, %v719
        %v791 = vadd.f32 %v695, %v742
        %v792 = vadd.f32 %v696, %v765
        %v793 = vadd.f32 %v697, %v788
        %794 = vst.msk [vmem:[#allocation4] sm:$0xff] %vm336, %v790
        %795 = vst.msk [vmem:[#allocation4 + $0x8] sm:$0xff] %vm336, %v791
        %796 = vst.msk [vmem:[#allocation4 + $0x10] sm:$0xff] %vm336, %v792
        %797 = vst.msk [vmem:[#allocation4 + $0x18] sm:$0xff] %vm336, %v793
        %798 = vst.msk [vmem:[#allocation2] sm:$0xff] %vm665, %v593
        %799 = vst.msk [vmem:[#allocation2 + $0x8] sm:$0xff] %vm665, %v594
        %800 = vst.msk [vmem:[#allocation2 + $0x10] sm:$0xff] %vm665, %v595
        %801 = vst.msk [vmem:[#allocation2 + $0x18] sm:$0xff] %vm665, %v596
        // Predicated region
        $region49: #{tpu_custom_call.1} parent=31 // pred_check
          %p802 = pneg %p302
        $region50: #{tpu_custom_call.1} parent=31 // pred_check_branch
          %804 = sbr.rel (%p802) target = $region52
        $region51: #{tpu_custom_call.1} parent=31 // pred_region
          %v805 = vld [vmem:[#allocation4] sm:$0xff]
          %v806 = vld [vmem:[#allocation4 + $0x8] sm:$0xff]
          %v807 = vld [vmem:[#allocation4 + $0x10] sm:$0xff]
          %v808 = vld [vmem:[#allocation4 + $0x18] sm:$0xff]
          %v809 = vld [vmem:[#allocation3] sm:$0xff]
          %v810 = vld [vmem:[#allocation3 + $0x8] sm:$0xff]
          %v811 = vld [vmem:[#allocation3 + $0x10] sm:$0xff]
          %v812 = vld [vmem:[#allocation3 + $0x18] sm:$0xff]
          %v813 = vrcp.pop %v809
          %v814 = vmul.f32 %v809, %v813
          %v815 = vsub.f32 1.0, %v814
          %v816 = vmul.f32 %v813, %v815
          %v817 = vadd.f32 %v813, %v816
          %vm818 = vweird.f32 %v809
          %vm819 = vweird.f32 %v813
          %vm820 = vmor %vm818, %vm819
          %v821 = vsel %vm820, %v813, %v817
          %v822 = vand.u32 2147483647, %v809
          %vm823 = vcmp.eq.f32.partialorder %v822, 8.507059e+37
          %v824 = vand.u32 %v809, 2147483648
          %v825 = vor.u32 1.1754944e-38, %v824
          %v826 = vsel %vm823, %v825, %v821
          %v827 = vrcp.pop %v810
          %v828 = vmul.f32 %v810, %v827
          %v829 = vsub.f32 1.0, %v828
          %v830 = vmul.f32 %v827, %v829
          %v831 = vadd.f32 %v827, %v830
          %vm832 = vweird.f32 %v810
          %vm833 = vweird.f32 %v827
          %vm834 = vmor %vm832, %vm833
          %v835 = vsel %vm834, %v827, %v831
          %v836 = vand.u32 2147483647, %v810
          %vm837 = vcmp.eq.f32.partialorder %v836, 8.507059e+37
          %v838 = vand.u32 %v810, 2147483648
          %v839 = vor.u32 1.1754944e-38, %v838
          %v840 = vsel %vm837, %v839, %v835
          %v841 = vrcp.pop %v811
          %v842 = vmul.f32 %v811, %v841
          %v843 = vsub.f32 1.0, %v842
          %v844 = vmul.f32 %v841, %v843
          %v845 = vadd.f32 %v841, %v844
          %vm846 = vweird.f32 %v811
          %vm847 = vweird.f32 %v841
          %vm848 = vmor %vm846, %vm847
          %v849 = vsel %vm848, %v841, %v845
          %v850 = vand.u32 2147483647, %v811
          %vm851 = vcmp.eq.f32.partialorder %v850, 8.507059e+37
          %v852 = vand.u32 %v811, 2147483648
          %v853 = vor.u32 1.1754944e-38, %v852
          %v854 = vsel %vm851, %v853, %v849
          %v855 = vrcp.pop %v812
          %v856 = vmul.f32 %v812, %v855
          %v857 = vsub.f32 1.0, %v856
          %v858 = vmul.f32 %v855, %v857
          %v859 = vadd.f32 %v855, %v858
          %vm860 = vweird.f32 %v812
          %vm861 = vweird.f32 %v855
          %vm862 = vmor %vm860, %vm861
          %v863 = vsel %vm862, %v855, %v859
          %v864 = vand.u32 2147483647, %v812
          %vm865 = vcmp.eq.f32.partialorder %v864, 8.507059e+37
          %v866 = vand.u32 %v812, 2147483648
          %v867 = vor.u32 1.1754944e-38, %v866
          %v868 = vsel %vm865, %v867, %v863
          %870 = vset.pattern.permute.xlu0 0
          %871 = vperm.xlu0 %870, %v826
          %v872 = vpop.permute.xlu0 %871
          %875 = vset.pattern.permute.xlu0 0
          %876 = vperm.xlu0 %875, %v840
          %v877 = vpop.permute.xlu0 %876
          %880 = vset.pattern.permute.xlu0 0
          %881 = vperm.xlu0 %880, %v854
          %v882 = vpop.permute.xlu0 %881
          %885 = vset.pattern.permute.xlu0 0
          %886 = vperm.xlu0 %885, %v868
          %v887 = vpop.permute.xlu0 %886
          %v889 = vmul.f32 %v805, %v872
          %v890 = vmul.f32 %v806, %v877
          %v891 = vmul.f32 %v807, %v882
          %v892 = vmul.f32 %v808, %v887
          %893 = vst.msk [vmem:[%s301] sm:$0xff] %vm336, %v889
          %894 = vst.msk [vmem:[%s301 + $0x8] sm:$0xff] %vm336, %v890
          %895 = vst.msk [vmem:[%s301 + $0x10] sm:$0xff] %vm336, %v891
          %896 = vst.msk [vmem:[%s301 + $0x18] sm:$0xff] %vm336, %v892
        $region52: #{tpu_custom_call.1} parent=31 // pred_fallthru
          _
        %s897 = sand.u32 %s136, 1
        %s898 = scalar_lea.sflag [#allocation7], %s897
        %s899 = sand.u32 %s136, 1
        %s900 = smul.addr %s899, 32
        %s901 = scalar_lea.vmem [#allocation11], %s900
        // Predicated region
        $region53: #{tpu_custom_call.1} parent=31 // pred_check
          %p902 = pneg %p146
        $region54: #{tpu_custom_call.1} parent=31 // pred_check_branch
          %904 = sbr.rel (%p902) target = $region56
        $region55: #{tpu_custom_call.1} parent=31 // pred_region
          %906 = vsyncadd %s898, 0
          %s907 = smul.addr %s28, 4
          %s908 = sadd.s32 %s29, %s907
          %s909 = smul.addr %s908, 8
          %s910 = scalar_lea.hbm %s3, %s909
          %s911 = sshll.u32 %s901, 4
          %s912 = int_to_ptr.vmem [resolvable:$true] %s911
          %s913 = sshll.u32 %s910, 4
          %s914 = int_to_ptr.hbm [resolvable:$true] %s913
          %919 = dma.vmem_to_hbm [thread:$0]  %s912, 512, %s914, %s898, 128, 128, 8
        $region56: #{tpu_custom_call.1} parent=31 // pred_fallthru
          _
      $region32: #{tpu_custom_call.1} parent=5 // pred_fallthru
        _
      %p920 = scmp.le.s32.totalorder 2, %s18
      // Predicated region
      $region57: #{tpu_custom_call.1} parent=5 // pred_check
        %p921 = pneg %p920
      $region58: #{tpu_custom_call.1} parent=5 // pred_check_branch
        %923 = sbr.rel (%p921) target = $region60
      $region59: #{tpu_custom_call.1} parent=5 // pred_region
        %s924 = ssub.s32 %s18, 2
        // Predicated region
        $region61: #{tpu_custom_call.1} parent=59 // pred_check
          %p925 = pneg %p152
        $region62: #{tpu_custom_call.1} parent=59 // pred_check_branch
          %927 = sbr.rel (%p925) target = $region64
        $region63: #{tpu_custom_call.1} parent=59 // pred_region
          %s928 = sand.u32 %s137, 1
          %s929 = scalar_lea.sflag [#allocation7], %s928
          %s930 = sand.u32 %s137, 1
          %s931 = smul.addr %s930, 32
          %s932 = scalar_lea.vmem [#allocation11], %s931
          %934 = dma.done %s929, 512
        $region64: #{tpu_custom_call.1} parent=59 // pred_fallthru
          _
      $region60: #{tpu_custom_call.1} parent=5 // pred_fallthru
        _
    $region6: #{tpu_custom_call.1} parent=1 // loop_footer
      %s22 = sadd.s32 1, %s18
    $region7: #{tpu_custom_call.1} parent=1 // loop_footer_branch
      %17 = sbr.rel target = $region3
    $region8: #{tpu_custom_call.1} parent=1 // loop_exit
      _
    %935 = vsyncpa [#allocation6], 1
    %s936 = scalar_lea.sflag [#allocation6], 1
    %937 = vsyncpa %s936, 1
    %938 = vsyncpa [#allocation9], 1
    %s939 = scalar_lea.sflag [#allocation9], 1
    %940 = vsyncpa %s939, 1
    %941 = vsyncpa [#allocation7], 1
    %s942 = scalar_lea.sflag [#allocation7], 1
    %943 = vsyncpa %s942, 1

</llo_original>
